<compile_context>
chip_gen: v6e
topology: v6e:2x2x1
jax: 0.10.0
libtpu: 0.0.40
codegen_flags: <defaults>
</compile_context>

<pallas_src>
import functools
import numpy as np
import jax
import jax.numpy as jnp
from jax.experimental import pallas as pl
from jax.experimental.pallas import tpu as pltpu

N_NODES = 16      # number of graph nodes
HIDDEN = 128      # feature dim (lane-dense)
N_SUBS = 16       # number of subgraphs
BATCH = 4         # number of candidate mutations for the batched path


def _node_func_kernel(w_ref, x_ref, sub_ref, out_ref):
    """out = sub + W @ x  -- one MXU matmul, one VPU add, one unmasked store."""
    out_ref[...] = sub_ref[...] + jnp.dot(
        w_ref[...], x_ref[...], preferred_element_type=jnp.float32)


@functools.partial(jax.jit, donate_argnums=(2,))
def node_func_forward(w, x, sub_reps):
    """Pallas equivalent of Node_func.forward (single problem).

    w:        [N_SUBS, N_NODES] f32  signed one-hot selection matrix
    x:        [N_NODES, HIDDEN] f32  node features
    sub_reps: [N_SUBS, HIDDEN]  f32  subgraph representations (donated)
    """
    S, D = sub_reps.shape
    vmem = pl.BlockSpec(memory_space=pltpu.MemorySpace.VMEM)
    return pl.pallas_call(
        _node_func_kernel,
        out_shape=jax.ShapeDtypeStruct((S, D), jnp.float32),
        in_specs=[vmem, vmem, vmem],          # whole arrays in VMEM, no grid
        out_specs=vmem,
        input_output_aliases={2: 0},          # sub_reps -> output (in-place)
    )(w, x, sub_reps)


@functools.partial(jax.jit, donate_argnums=(2,))
def node_func_forward_batched(w_b, x, sub_b):
    """Batched variant: B candidate mutations in one pallas_call.

    w_b:   [B, N_SUBS, N_NODES] f32
    x:     [N_NODES, HIDDEN]    f32  (shared across the batch)
    sub_b: [B, N_SUBS, HIDDEN]  f32  (donated)
    """
    B, S, N = w_b.shape
    D = x.shape[1]
    return pl.pallas_call(
        _node_func_kernel,
        out_shape=jax.ShapeDtypeStruct((B, S, D), jnp.float32),
        grid=(B,),
        in_specs=[
            pl.BlockSpec((None, S, N), lambda b: (b, 0, 0)),
            pl.BlockSpec((N, D), lambda b: (0, 0)),
            pl.BlockSpec((None, S, D), lambda b: (b, 0, 0)),
        ],
        out_specs=pl.BlockSpec((None, S, D), lambda b: (b, 0, 0)),
        input_output_aliases={2: 0},          # sub_b -> output (in-place)
        compiler_params=pltpu.CompilerParams(
            dimension_semantics=("parallel",)),   # shards batch over v7x's 2 TCs
    )(w_b, x, sub_b)


def _build_node_add_1(n_nodes, n_subs, seed=0):
    """Deterministic re-implementation of __init__ for op='node_add_1'
    on a simple ring graph (host-side glue, not kernel compute)."""
    rng = np.random.default_rng(seed)
    adj = {j: [(j - 1) % n_nodes, (j + 1) % n_nodes] for j in range(n_nodes)}
    subs = [[(2 * i) % n_nodes, (2 * i + 1) % n_nodes] for i in range(n_subs)]
    new_nodes, new_subs = [], []
    for sub in subs:
        neighbor = []
        for j in sub:
            neighbor.extend(adj[j])
        nei = sorted(set(neighbor) - set(sub))
        new_node = rng.choice(nei, 1).tolist() if nei else []
        new_nodes.append(new_node)
        new_subs.append(sub + new_node)
    return subs, new_nodes, new_subs


def _build_selection_matrix(new_nodes, n_subs, n_nodes, sign):
    """Host-side construction of W[s, n] = sign * #{k : new_nodes[s][k] == n}."""
    w = np.zeros((n_subs, n_nodes), dtype=np.float32)
    for i, nodes in enumerate(new_nodes):
        for v in nodes:
            w[i, v] += sign
    return w


if __name__ == "__main__":
    op = 'node_add_1'
    sign = 1.0 if op in ('node_add_1', 'node_add_2', 'none') else -1.0

    # --- single-problem path (matches Node_func.forward) ------------------
    subs, new_nodes, new_subs = _build_node_add_1(N_NODES, N_SUBS, seed=0)
    w_np = _build_selection_matrix(new_nodes, N_SUBS, N_NODES, sign)

    key = jax.random.PRNGKey(0)
    kx, ks, kb = jax.random.split(key, 3)
    x = jax.random.normal(kx, (N_NODES, HIDDEN), dtype=jnp.float32)
    sub_reps = jax.random.normal(ks, (N_SUBS, HIDDEN), dtype=jnp.float32)

    x_np = np.asarray(x)
    sub_np = np.asarray(sub_reps)          # snapshot before donation

    out = node_func_forward(jnp.asarray(w_np), x, sub_reps)
    out = jax.block_until_ready(out)

    ref = sub_np + w_np @ x_np
    np.testing.assert_allclose(np.asarray(out), ref, rtol=1e-5, atol=1e-5)

    # --- batched path (B candidate mutations, one pallas_call) ------------
    w_b_np = np.stack([
        _build_selection_matrix(
            _build_node_add_1(N_NODES, N_SUBS, seed=s)[1], N_SUBS, N_NODES, sign)
        for s in range(BATCH)
    ])
    sub_b = jax.random.normal(kb, (BATCH, N_SUBS, HIDDEN), dtype=jnp.float32)
    sub_b_np = np.asarray(sub_b)           # snapshot before donation

    out_b = node_func_forward_batched(jnp.asarray(w_b_np), x, sub_b)
    out_b = jax.block_until_ready(out_b)

    ref_b = sub_b_np + np.einsum('bsn,nd->bsd', w_b_np, x_np)
    np.testing.assert_allclose(np.asarray(out_b), ref_b, rtol=1e-5, atol=1e-5)

    # TODO(synk): the networkx connectivity checks / random neighbor sampling in
    # __init__ are host-side graph mutations with no device-kernel equivalent.
    print("KERNEL_OK")
</pallas_src>

<mosaic_0001>
module attributes {stable_mosaic.version = 11 : i64} {
  func.func @_node_func_kernel(%arg0: memref<16x16xf32, #tpu.memory_space<vmem>>, %arg1: memref<16x128xf32, #tpu.memory_space<vmem>>, %arg2: memref<16x128xf32, #tpu.memory_space<vmem>>, %arg3: memref<16x128xf32, #tpu.memory_space<vmem>>) attributes {dimension_semantics = [], scalar_prefetch = 0 : i64, scratch_operands = 0 : i64, tpu.core_type = #tpu.core_type<tc>} {
    %c0 = arith.constant 0 : index
    %c0_0 = arith.constant 0 : index
    %0 = vector.load %arg2[%c0, %c0_0] : memref<16x128xf32, #tpu.memory_space<vmem>>, vector<16x128xf32>
    %c0_1 = arith.constant 0 : index
    %c0_2 = arith.constant 0 : index
    %1 = vector.load %arg0[%c0_1, %c0_2] : memref<16x16xf32, #tpu.memory_space<vmem>>, vector<16x16xf32>
    %c0_3 = arith.constant 0 : index
    %c0_4 = arith.constant 0 : index
    %2 = vector.load %arg1[%c0_3, %c0_4] : memref<16x128xf32, #tpu.memory_space<vmem>>, vector<16x128xf32>
    %cst = arith.constant dense<0.000000e+00> : vector<16x128xf32>
    %3 = tpu.matmul %1, %2, %cst {dimension_numbers = #tpu.dot_dimension_numbers<[1], [0], [0], [1], [0, 0, 1, 1], [], []>} : vector<16x16xf32>, vector<16x128xf32>, vector<16x128xf32> -> vector<16x128xf32>
    %4 = arith.addf %0, %3 : vector<16x128xf32>
    %c0_5 = arith.constant 0 : index
    %c0_6 = arith.constant 0 : index
    %5 = vector.load %arg3[%c0_5, %c0_6] : memref<16x128xf32, #tpu.memory_space<vmem>>, vector<16x128xf32>
    tpu.vector_store %arg3[%c0_5, %c0_6], %4 {strides = array<i32>} : memref<16x128xf32, #tpu.memory_space<vmem>>, vector<16x128xf32>,
    return
  }
}

</mosaic_0001>

<llo_original>
// kernel: node_func_forward.1
$region0: #{node_func_forward.1}
  #allocation0 [shape = 'u32[]', space=smem, size = 0x4, offset = 0x4, fixed_abs, tag = 'smem constant byte address 0x4 - core index']
  #allocation1 [shape = 'u32[144,128]{1,0:T(1,128)}', space=vmem, size = 0x12000, scoped, tag = 'internal scratch']
  %s0 = inlined_call_operand.hbm [shape: f32[16,16], index: 0, kind: input, shape index: {}]
  %s1 = inlined_call_operand.hbm [shape: f32[16,128], index: 1, kind: input, shape index: {}]
  %s2 = inlined_call_operand.hbm [shape: f32[16,128], index: 2, kind: input, shape index: {}, may-alias: {2,3}]
  %s3 = inlined_call_operand.hbm [shape: f32[16,128], index: 3, kind: output, shape index: {}, may-alias: {2,3}]
  %s4 = sld [smem:[#allocation0]]
  $region34: #{node_func_forward.1} parent=0
    _
  %s6 = ssub.s32 1, %s4
  %s7 = scalar_select 0, %s6, %s4
  $region1: #{node_func_forward.1} parent=0
    #allocation2 [shape = 'u8[8192]{0}', space=vmem, size = 0x2000, scoped, tag = 'input window, operand 0, single buffered']
    #allocation3 [shape = 's32[1]{0}', space=sflag, size = 0x4, scoped, tag = 'scoped memory for node_func_forward.1']
    #allocation4 [shape = 's32[1]{0}', space=sflag, size = 0x4, scoped, tag = 'scoped memory for node_func_forward.1']
    #allocation5 [shape = 'u8[8192]{0}', space=vmem, size = 0x2000, scoped, tag = 'input window, operand 1, single buffered']
    #allocation6 [shape = 's32[1]{0}', space=sflag, size = 0x4, scoped, tag = 'scoped memory for node_func_forward.1']
    #allocation7 [shape = 'u8[8192]{0}', space=vmem, size = 0x2000, scoped, tag = 'input window, operand 2, single buffered']
    #allocation8 [shape = 'u8[8192]{0}', space=vmem, size = 0x2000, scoped, tag = 'output window, operand 0, single buffered']
    %8 = vsyncpa [#allocation3], 0
    %9 = vsyncpa [#allocation6], 0
    %10 = vsyncpa [#allocation4], 0
    // Predicated region
    $region2: #{node_func_forward.1} parent=1 // pred_check
      _
    $region3: #{node_func_forward.1} parent=1 // pred_check_branch
      %12 = sbr.rel (0) target = $region5
    $region4: #{node_func_forward.1} parent=1 // pred_region
      %s14 = ssub.s32 256, 256
      %15 = vsyncadd [#allocation3], %s14
      %s16 = sshll.u32 [#allocation2], 4
      %s17 = int_to_ptr.vmem [resolvable:$true] %s16
      %22 = dma.hbm_to_vmem [thread:$0]  %s0, 256, %s17, [#allocation3], 128, 128, 8
    $region5: #{node_func_forward.1} parent=1 // pred_fallthru
      _
    // Predicated region
    $region6: #{node_func_forward.1} parent=1 // pred_check
      _
    $region7: #{node_func_forward.1} parent=1 // pred_check_branch
      %24 = sbr.rel (0) target = $region9
    $region8: #{node_func_forward.1} parent=1 // pred_region
      %s26 = ssub.s32 256, 256
      %27 = vsyncadd [#allocation6], %s26
      %s28 = sshll.u32 [#allocation5], 4
      %s29 = int_to_ptr.vmem [resolvable:$true] %s28
      %34 = dma.hbm_to_vmem [thread:$0]  %s1, 256, %s29, [#allocation6], 128, 128, 8
    $region9: #{node_func_forward.1} parent=1 // pred_fallthru
      _
    // Predicated region
    $region10: #{node_func_forward.1} parent=1 // pred_check
      _
    $region11: #{node_func_forward.1} parent=1 // pred_check_branch
      %36 = sbr.rel (0) target = $region13
    $region12: #{node_func_forward.1} parent=1 // pred_region
      %s38 = ssub.s32 256, 256
      %39 = vsyncadd [#allocation6], %s38
      %s40 = sshll.u32 [#allocation7], 4
      %s41 = int_to_ptr.vmem [resolvable:$true] %s40
      %46 = dma.hbm_to_vmem [thread:$0]  %s2, 256, %s41, [#allocation6], 128, 128, 8
    $region13: #{node_func_forward.1} parent=1 // pred_fallthru
      _
    // Predicated region
    $region14: #{node_func_forward.1} parent=1 // pred_check
      _
    $region15: #{node_func_forward.1} parent=1 // pred_check_branch
      %48 = sbr.rel (0) target = $region17
    $region16: #{node_func_forward.1} parent=1 // pred_region
      %49 = dma.done [#allocation3], 256
    $region17: #{node_func_forward.1} parent=1 // pred_fallthru
      _
    // Predicated region
    $region18: #{node_func_forward.1} parent=1 // pred_check
      _
    $region19: #{node_func_forward.1} parent=1 // pred_check_branch
      %51 = sbr.rel (0) target = $region21
    $region20: #{node_func_forward.1} parent=1 // pred_region
      %52 = dma.done [#allocation6], 256
    $region21: #{node_func_forward.1} parent=1 // pred_fallthru
      _
    // Predicated region
    $region22: #{node_func_forward.1} parent=1 // pred_check
      _
    $region23: #{node_func_forward.1} parent=1 // pred_check_branch
      %54 = sbr.rel (0) target = $region25
    $region24: #{node_func_forward.1} parent=1 // pred_region
      %55 = dma.done [#allocation6], 256
    $region25: #{node_func_forward.1} parent=1 // pred_fallthru
      _
    %v56 = vld [vmem:[#allocation7] sm:$0xff]
    %v57 = vld [vmem:[#allocation7 + $0x8] sm:$0xff]
    %v58 = vld [vmem:[#allocation2] sm:$0xff]
    %v59 = vld [vmem:[#allocation2 + $0x8] sm:$0xff]
    %v60 = vld [vmem:[#allocation5] sm:$0xff]
    %v61 = vld [vmem:[#allocation5 + $0x8] sm:$0xff]
    %vm62 = vcmask 130048
    %v64 = vsel %vm62, %v58, 0
    %v67 = vsel %vm62, %v59, 0
    %69 = vmatprep.subr.mxu0 0.0
    %70 = vmatpush1.msra.mxu0 0.0
    %71 = vmatprep.subr.mxu0 0.0
    %72 = vmatpush1.msra.mxu0 0.0
    %73 = vmatprep.subr.mxu0 0.0
    %74 = vmatpush1.msra.mxu0 0.0
    %75 = vmatprep.subr.mxu0 0.0
    %76 = vmatpush1.msra.mxu0 0.0
    %77 = vmatprep.subr.mxu0 0.0
    %78 = vmatpush1.msra.mxu0 0.0
    %79 = vmatprep.subr.mxu0 0.0
    %80 = vmatpush1.msra.mxu0 0.0
    %81 = vmatprep.subr.mxu0 0.0
    %82 = vmatpush1.msra.mxu0 0.0
    %83 = vmatprep.subr.mxu0 0.0
    %84 = vmatpush1.msra.mxu0 0.0
    %85 = vmatprep.subr.mxu0 0.0
    %86 = vmatpush1.msra.mxu0 0.0
    %87 = vmatprep.subr.mxu0 0.0
    %88 = vmatpush1.msra.mxu0 0.0
    %89 = vmatprep.subr.mxu0 0.0
    %90 = vmatpush1.msra.mxu0 0.0
    %91 = vmatprep.subr.mxu0 0.0
    %92 = vmatpush1.msra.mxu0 0.0
    %93 = vmatprep.subr.mxu0 0.0
    %94 = vmatpush1.msra.mxu0 0.0
    %95 = vmatprep.subr.mxu0 0.0
    %96 = vmatpush1.msra.mxu0 0.0
    %97 = vmatprep.subr.mxu0 0.0
    %98 = vmatpush1.msra.mxu0 %v61
    %99 = vmatprep.subr.mxu0 0.0
    %100 = vmatpush1.msra.mxu0 %v60
    %101 = vmatprep.subr.mxu0 0.0
    %102 = vmatpush2.msra.mxu0 0.0
    %103 = vmatprep.subr.mxu0 0.0
    %104 = vmatpush2.msra.mxu0 0.0
    %105 = vmatprep.subr.mxu0 0.0
    %106 = vmatpush2.msra.mxu0 0.0
    %107 = vmatprep.subr.mxu0 0.0
    %108 = vmatpush2.msra.mxu0 0.0
    %109 = vmatprep.subr.mxu0 0.0
    %110 = vmatpush2.msra.mxu0 0.0
    %111 = vmatprep.subr.mxu0 0.0
    %112 = vmatpush2.msra.mxu0 0.0
    %113 = vmatprep.subr.mxu0 0.0
    %114 = vmatpush2.msra.mxu0 0.0
    %115 = vmatprep.subr.mxu0 0.0
    %116 = vmatpush2.msra.mxu0 0.0
    %117 = vmatprep.subr.mxu0 0.0
    %118 = vmatpush2.msra.mxu0 0.0
    %119 = vmatprep.subr.mxu0 0.0
    %120 = vmatpush2.msra.mxu0 0.0
    %121 = vmatprep.subr.mxu0 0.0
    %122 = vmatpush2.msra.mxu0 0.0
    %123 = vmatprep.subr.mxu0 0.0
    %124 = vmatpush2.msra.mxu0 0.0
    %125 = vmatprep.subr.mxu0 0.0
    %126 = vmatpush2.msra.mxu0 0.0
    %127 = vmatprep.subr.mxu0 0.0
    %128 = vmatpush2.msra.mxu0 0.0
    %129 = vmatprep.subr.mxu0 0.0
    %130 = vmatpush2.msra.mxu0 0.0
    %131 = vmatprep.subr.mxu0 0.0
    %132 = vmatpush2.msra.mxu0 0.0
    %133 = vmatprep.mubr.f32.mxu0 0.0
    %134 = vmatmul.mubr.f32.gmra.mxu0 %v64
    %v135 = vpop.f32.mrf.mxu0
    %v136 = vadd.f32 0.0, %v135
    %v137 = vpop.f32.mrf.mxu0
    %138 = vmatprep.mubr.f32.mxu0 0.0
    %139 = vmatmul.mubr.f32.gmra.mxu0 %v67
    %v140 = vpop.f32.mrf.mxu0
    %v141 = vadd.f32 0.0, %v140
    %v142 = vpop.f32.mrf.mxu0
    %143 = vdwg.mxu0
    %v144 = vadd.f32 %v56, %v136
    %v145 = vadd.f32 %v57, %v141
    %146 = vst [vmem:[#allocation8] sm:$0xff] %v144
    %147 = vst [vmem:[#allocation8 + $0x8] sm:$0xff] %v145
    // Predicated region
    $region26: #{node_func_forward.1} parent=1 // pred_check
      _
    $region27: #{node_func_forward.1} parent=1 // pred_check_branch
      %149 = sbr.rel (0) target = $region29
    $region28: #{node_func_forward.1} parent=1 // pred_region
      %s151 = ssub.s32 256, 256
      %152 = vsyncadd [#allocation4], %s151
      %s153 = sshll.u32 [#allocation8], 4
      %s154 = int_to_ptr.vmem [resolvable:$true] %s153
      %159 = dma.vmem_to_hbm [thread:$0]  %s154, 256, %s3, [#allocation4], 128, 128, 8
    $region29: #{node_func_forward.1} parent=1 // pred_fallthru
      _
    // Predicated region
    $region30: #{node_func_forward.1} parent=1 // pred_check
      _
    $region31: #{node_func_forward.1} parent=1 // pred_check_branch
      %161 = sbr.rel (0) target = $region33
    $region32: #{node_func_forward.1} parent=1 // pred_region
      %162 = dma.done [#allocation4], 256
    $region33: #{node_func_forward.1} parent=1 // pred_fallthru
      _
    %163 = vsyncpa [#allocation3], 1
    %164 = vsyncpa [#allocation6], 1
    %165 = vsyncpa [#allocation4], 1

</llo_original>
